<compile_context>
chip_gen: v7x
topology: tpu7x:2x2x1
jax: 0.10.0
libtpu: 0.0.40
codegen_flags: <defaults>
</compile_context>

<pallas_src>
import functools

import jax
import jax.numpy as jnp
from jax.experimental import pallas as pl
from jax.experimental.pallas import tpu as pltpu

NEG_SLOPE = 0.01  # torch.nn.LeakyReLU default


def _round_up(x, m):
    return ((x + m - 1) // m) * m


def _leaky_relu(x):
    # max(x, a*x) == LeakyReLU for 0 < a < 1; mul+max (2 VPU ops), no select.
    return jnp.maximum(x, NEG_SLOPE * x)


def _mlp_kernel(z_ref, w_ref, b_ref, o_ref, *, hidden_dim, in_dim, out_pad):
    """One lane-dense row tile.

    z_ref: (in_dim, tile)    rows on the 128-lane axis
    w_ref: (4H, H)           packed weights, layer k in rows [kH, (k+1)H)
    b_ref: (4H, 1)           packed biases (column vectors)
    o_ref: (out_pad, tile)   out_pad = round_up(out_dim, 8); extra rows are 0
    """
    H = hidden_dim
    f32 = jnp.float32

    z = z_ref[...]                                     # native dtype, no cast

    # Static, sublane-aligned ref slices (views; no per-step select work).
    w1 = w_ref[0 * H:1 * H, 0:in_dim]                  # (H, 6)
    w2 = w_ref[1 * H:2 * H, :]                         # (H, H)
    w3 = w_ref[2 * H:3 * H, :]                         # (H, H)
    w4 = w_ref[3 * H:3 * H + out_pad, :]               # (8, H); rows >= out_dim are 0
    b1 = b_ref[0 * H:1 * H, :]                         # (H, 1)
    b2 = b_ref[1 * H:2 * H, :]
    b3 = b_ref[2 * H:3 * H, :]
    b4 = b_ref[3 * H:3 * H + out_pad, :]               # (8, 1)

    # Fused layer 1: single K=6 contraction (concat done once in the wrapper).
    h = _leaky_relu(jnp.dot(w1, z, preferred_element_type=f32) + b1)
    h = _leaky_relu(jnp.dot(w2, h, preferred_element_type=f32) + b2)
    h = _leaky_relu(jnp.dot(w3, h, preferred_element_type=f32) + b3)
    y = jnp.dot(w4, h, preferred_element_type=f32) + b4      # (out_pad, tile)

    o_ref[...] = y.astype(o_ref.dtype)                 # whole-vreg 8-row store


def pack_params(params):
    """Pack torch-layout weights wK (out, in) / biases bK (out,) into two
    tile-aligned slabs.  Call ONCE at parameter-load time (not per forward).

    Returns (w_slab (4H, H), b_slab (4H, 1), dims=(H, in_dim, out_dim, out_pad)).
    Slabs stay in the parameter dtype for exact parity with the f32 torch
    module; cast them to bf16 here if halving weight storage is preferred.
    """
    H = params["w2"].shape[0]
    in_dim = params["w1"].shape[1]
    out_dim = params["w4"].shape[0]
    out_pad = _round_up(out_dim, 8)
    assert H % 8 == 0, "hidden_dim should be a multiple of 8 for aligned slices"
    assert in_dim <= H and out_pad <= H
    dtype = params["w1"].dtype
    w_slab = jnp.zeros((4 * H, H), dtype)
    b_slab = jnp.zeros((4 * H, 1), dtype)
    for k in range(4):
        wk = params[f"w{k + 1}"].astype(dtype)
        bk = params[f"b{k + 1}"].astype(dtype)
        o, i = wk.shape
        w_slab = w_slab.at[k * H:k * H + o, 0:i].set(wk)
        b_slab = b_slab.at[k * H:k * H + o, 0].set(bk)
    return w_slab, b_slab, (H, in_dim, out_dim, out_pad)


def moments_decoder_forward(w_i, w_o, w_slab, b_slab, dims, *, row_tile=32768):
    """w_i, w_o: (..., 3).  w_slab / b_slab / dims come from pack_params()."""
    H, in_dim, out_dim, out_pad = dims
    assert w_i.shape == w_o.shape
    assert w_i.shape[-1] + w_o.shape[-1] == in_dim
    lead_shape = w_i.shape[:-1]
    out_dtype = jnp.result_type(w_i.dtype, w_slab.dtype)

    # Lane-dense input: rows on the 128-lane axis.  Single fused concat + T.
    z_t = jnp.concatenate([w_i, w_o], axis=-1).reshape(-1, in_dim).T  # (6, n)
    n_rows = z_t.shape[1]

    # Big tile (amortises step overhead + MXU fills), clamped so mid-sized
    # batches still get >= ~4 grid steps (v7x megacore + DMA pipelining).
    tile = max(128, min(_round_up(row_tile, 128),
                        _round_up(pl.cdiv(n_rows, 4), 128)))
    grid = (pl.cdiv(n_rows, tile),)   # partial last block masked by Pallas

    kernel = functools.partial(_mlp_kernel, hidden_dim=H, in_dim=in_dim,
                               out_pad=out_pad)
    out_t = pl.pallas_call(
        kernel,
        out_shape=jax.ShapeDtypeStruct((out_pad, n_rows), out_dtype),
        grid_spec=pltpu.PrefetchScalarGridSpec(
            num_scalar_prefetch=0,
            grid=grid,
            in_specs=[
                pl.BlockSpec((in_dim, tile), lambda i: (0, i)),
                # Constant index maps: tiny slabs stay resident in VMEM.
                pl.BlockSpec((4 * H, H), lambda i: (0, 0)),
                pl.BlockSpec((4 * H, 1), lambda i: (0, 0)),
            ],
            out_specs=pl.BlockSpec((out_pad, tile), lambda i: (0, i)),
        ),
        compiler_params=pltpu.CompilerParams(
            dimension_semantics=("parallel",),     # megacore sharding on v7x
            vmem_limit_bytes=32 * 1024 * 1024,     # big tile also fits v5e
        ),
    )(z_t, w_slab, b_slab)

    out = out_t[:out_dim, :].T
    return out.reshape(*lead_shape, out_dim)


def init_params(key, hidden_dim=16, output_dim=6, in_dim=6, dtype=jnp.float32):
    """torch.nn.Linear default init: weight (out, in), bias (out,),
    U(-1/sqrt(fan_in), +1/sqrt(fan_in))."""
    dims = [(hidden_dim, in_dim), (hidden_dim, hidden_dim),
            (hidden_dim, hidden_dim), (output_dim, hidden_dim)]
    params = {}
    for idx, (fan_out, fan_in) in enumerate(dims, start=1):
        key, kw, kb = jax.random.split(key, 3)
        bound = 1.0 / float(fan_in) ** 0.5
        params[f"w{idx}"] = jax.random.uniform(
            kw, (fan_out, fan_in), dtype, minval=-bound, maxval=bound)
        params[f"b{idx}"] = jax.random.uniform(
            kb, (fan_out,), dtype, minval=-bound, maxval=bound)
    return params


def _reference_forward(w_i, w_o, params):
    z = jnp.concatenate([w_i, w_o], axis=-1)
    h = z @ params["w1"].T + params["b1"]
    h = jnp.where(h > 0, h, NEG_SLOPE * h)
    h = h @ params["w2"].T + params["b2"]
    h = jnp.where(h > 0, h, NEG_SLOPE * h)
    h = h @ params["w3"].T + params["b3"]
    h = jnp.where(h > 0, h, NEG_SLOPE * h)
    return h @ params["w4"].T + params["b4"]


if __name__ == "__main__":
    key = jax.random.PRNGKey(0)
    k_p, k_i, k_o, k_i2, k_o2 = jax.random.split(key, 5)

    hidden_dim, output_dim = 16, 6
    params = init_params(k_p, hidden_dim=hidden_dim, output_dim=output_dim)
    w_slab, b_slab, dims = pack_params(params)          # packed ONCE

    fwd = jax.jit(functools.partial(
        moments_decoder_forward, w_slab=w_slab, b_slab=b_slab, dims=dims))

    # Case 1: flat batch whose length is NOT a multiple of 128 (exercises the
    # partial-last-block masking and a >= 2-step grid).
    n = 200
    w_i = jax.random.normal(k_i, (n, 3), jnp.float32)
    w_o = jax.random.normal(k_o, (n, 3), jnp.float32)
    out = jax.block_until_ready(fwd(w_i, w_o))
    ref = _reference_forward(w_i, w_o, params)
    assert out.shape == (n, output_dim), out.shape
    assert jnp.allclose(out, ref, atol=2e-5, rtol=2e-5), \
        float(jnp.max(jnp.abs(out - ref)))

    # Case 2: multi-dimensional leading batch (reshape glue).
    w_i2 = jax.random.normal(k_i2, (2, 4, 16, 3), jnp.float32)
    w_o2 = jax.random.normal(k_o2, (2, 4, 16, 3), jnp.float32)
    out2 = jax.block_until_ready(fwd(w_i2, w_o2))
    ref2 = _reference_forward(w_i2, w_o2, params)
    assert out2.shape == (2, 4, 16, output_dim), out2.shape
    assert jnp.allclose(out2, ref2, atol=2e-5, rtol=2e-5), \
        float(jnp.max(jnp.abs(out2 - ref2)))

    print("KERNEL_OK")
</pallas_src>

<mosaic_0001>
module attributes {stable_mosaic.version = 11 : i64} {
  func.func @_mlp_kernel(%arg0: i32, %arg1: memref<6x128xf32, #tpu.memory_space<vmem>>, %arg2: memref<64x16xf32, #tpu.memory_space<vmem>>, %arg3: memref<64x1xf32, #tpu.memory_space<vmem>>, %arg4: memref<8x128xf32, #tpu.memory_space<vmem>>) attributes {dimension_semantics = [#tpu.dimension_semantics<parallel>], iteration_bounds = array<i64: 2>, scalar_prefetch = 0 : i64, scratch_operands = 0 : i64, tpu.core_type = #tpu.core_type<tc>, window_params = [{transform_indices = @transform_0, window_bounds = array<i64: 6, 128>}, {pipeline_mode = #tpu.pipeline_mode<synchronous>, transform_indices = @transform_1, window_bounds = array<i64: 64, 16>}, {pipeline_mode = #tpu.pipeline_mode<synchronous>, transform_indices = @transform_2, window_bounds = array<i64: 64, 1>}, {transform_indices = @transform_3, window_bounds = array<i64: 8, 128>}]} {
    %c0 = arith.constant 0 : index
    %c0_0 = arith.constant 0 : index
    %0 = vector.load %arg1[%c0, %c0_0] : memref<6x128xf32, #tpu.memory_space<vmem>>, vector<6x128xf32>
    %c0_1 = arith.constant 0 : index
    %c0_2 = arith.constant 0 : index
    %1 = vector.load %arg2[%c0_1, %c0_2] : memref<64x16xf32, #tpu.memory_space<vmem>>, vector<16x6xf32>
    %c16 = arith.constant 16 : index
    %c0_3 = arith.constant 0 : index
    %2 = vector.load %arg2[%c16, %c0_3] : memref<64x16xf32, #tpu.memory_space<vmem>>, vector<16x16xf32>
    %c32 = arith.constant 32 : index
    %c0_4 = arith.constant 0 : index
    %3 = vector.load %arg2[%c32, %c0_4] : memref<64x16xf32, #tpu.memory_space<vmem>>, vector<16x16xf32>
    %c48 = arith.constant 48 : index
    %c0_5 = arith.constant 0 : index
    %4 = vector.load %arg2[%c48, %c0_5] : memref<64x16xf32, #tpu.memory_space<vmem>>, vector<8x16xf32>
    %c0_6 = arith.constant 0 : index
    %c0_7 = arith.constant 0 : index
    %5 = vector.load %arg3[%c0_6, %c0_7] : memref<64x1xf32, #tpu.memory_space<vmem>>, vector<16x1xf32>
    %c16_8 = arith.constant 16 : index
    %c0_9 = arith.constant 0 : index
    %6 = vector.load %arg3[%c16_8, %c0_9] : memref<64x1xf32, #tpu.memory_space<vmem>>, vector<16x1xf32>
    %c32_10 = arith.constant 32 : index
    %c0_11 = arith.constant 0 : index
    %7 = vector.load %arg3[%c32_10, %c0_11] : memref<64x1xf32, #tpu.memory_space<vmem>>, vector<16x1xf32>
    %c48_12 = arith.constant 48 : index
    %c0_13 = arith.constant 0 : index
    %8 = vector.load %arg3[%c48_12, %c0_13] : memref<64x1xf32, #tpu.memory_space<vmem>>, vector<8x1xf32>
    %cst = arith.constant dense<0.000000e+00> : vector<16x128xf32>
    %9 = tpu.matmul %1, %0, %cst {dimension_numbers = #tpu.dot_dimension_numbers<[1], [0], [0], [1], [0, 0, 1, 1], [], []>} : vector<16x6xf32>, vector<6x128xf32>, vector<16x128xf32> -> vector<16x128xf32>
    %10 = vector.broadcast %5 : vector<16x1xf32> to vector<16x128xf32>
    %11 = arith.addf %9, %10 : vector<16x128xf32>
    %cst_14 = arith.constant 0.00999999977 : f32
    %12 = vector.broadcast %cst_14 : f32 to vector<16x128xf32>
    %13 = arith.mulf %12, %11 : vector<16x128xf32>
    %14 = arith.maximumf %11, %13 : vector<16x128xf32>
    %cst_15 = arith.constant dense<0.000000e+00> : vector<16x128xf32>
    %15 = tpu.matmul %2, %14, %cst_15 {dimension_numbers = #tpu.dot_dimension_numbers<[1], [0], [0], [1], [0, 0, 1, 1], [], []>} : vector<16x16xf32>, vector<16x128xf32>, vector<16x128xf32> -> vector<16x128xf32>
    %16 = vector.broadcast %6 : vector<16x1xf32> to vector<16x128xf32>
    %17 = arith.addf %15, %16 : vector<16x128xf32>
    %cst_16 = arith.constant 0.00999999977 : f32
    %18 = vector.broadcast %cst_16 : f32 to vector<16x128xf32>
    %19 = arith.mulf %18, %17 : vector<16x128xf32>
    %20 = arith.maximumf %17, %19 : vector<16x128xf32>
    %cst_17 = arith.constant dense<0.000000e+00> : vector<16x128xf32>
    %21 = tpu.matmul %3, %20, %cst_17 {dimension_numbers = #tpu.dot_dimension_numbers<[1], [0], [0], [1], [0, 0, 1, 1], [], []>} : vector<16x16xf32>, vector<16x128xf32>, vector<16x128xf32> -> vector<16x128xf32>
    %22 = vector.broadcast %7 : vector<16x1xf32> to vector<16x128xf32>
    %23 = arith.addf %21, %22 : vector<16x128xf32>
    %cst_18 = arith.constant 0.00999999977 : f32
    %24 = vector.broadcast %cst_18 : f32 to vector<16x128xf32>
    %25 = arith.mulf %24, %23 : vector<16x128xf32>
    %26 = arith.maximumf %23, %25 : vector<16x128xf32>
    %cst_19 = arith.constant dense<0.000000e+00> : vector<8x128xf32>
    %27 = tpu.matmul %4, %26, %cst_19 {dimension_numbers = #tpu.dot_dimension_numbers<[1], [0], [0], [1], [0, 0, 1, 1], [], []>} : vector<8x16xf32>, vector<16x128xf32>, vector<8x128xf32> -> vector<8x128xf32>
    %28 = vector.broadcast %8 : vector<8x1xf32> to vector<8x128xf32>
    %29 = arith.addf %27, %28 : vector<8x128xf32>
    %c0_20 = arith.constant 0 : index
    %c0_21 = arith.constant 0 : index
    %30 = vector.load %arg4[%c0_20, %c0_21] : memref<8x128xf32, #tpu.memory_space<vmem>>, vector<8x128xf32>
    tpu.vector_store %arg4[%c0_20, %c0_21], %29 {strides = array<i32>} : memref<8x128xf32, #tpu.memory_space<vmem>>, vector<8x128xf32>,
    return
  }
  func.func @transform_0(%arg0: i32) -> (i32, i32) {
    %c0_i32 = arith.constant 0 : i32
    %c0_i32_0 = arith.constant 0 : i32
    return %c0_i32, %arg0 : i32, i32
  }
  func.func @transform_1(%arg0: i32) -> (i32, i32) {
    %c0_i32 = arith.constant 0 : i32
    %c0_i32_0 = arith.constant 0 : i32
    %c0_i32_1 = arith.constant 0 : i32
    return %c0_i32, %c0_i32_0 : i32, i32
  }
  func.func @transform_2(%arg0: i32) -> (i32, i32) {
    %c0_i32 = arith.constant 0 : i32
    %c0_i32_0 = arith.constant 0 : i32
    %c0_i32_1 = arith.constant 0 : i32
    return %c0_i32, %c0_i32_0 : i32, i32
  }
  func.func @transform_3(%arg0: i32) -> (i32, i32) {
    %c0_i32 = arith.constant 0 : i32
    %c0_i32_0 = arith.constant 0 : i32
    return %c0_i32, %arg0 : i32, i32
  }
}

</mosaic_0001>

<llo_original>
// kernel: moments_decoder_forward.1
$region0: #{moments_decoder_forward.1}
  #allocation0 [shape = 'u32[]', space=smem, size = 0x4, offset = 0x4, fixed_abs, tag = 'smem constant byte address 0x4 - core index']
  #allocation1 [shape = 'u32[144,128]{1,0:T(1,128)}', space=vmem, size = 0x12000, scoped, tag = 'internal scratch']
  %s0 = inlined_call_operand.vmem [shape: f32[6,200], index: 0, kind: input, shape index: {}]
  %s1 = inlined_call_operand.hbm [shape: f32[64,16], index: 1, kind: input, shape index: {}]
  %s2 = inlined_call_operand.hbm [shape: f32[64,1], index: 2, kind: input, shape index: {}]
  %s3 = inlined_call_operand.vmem [shape: f32[8,200], index: 3, kind: output, shape index: {}]
  %s4 = sld [smem:[#allocation0]]
  $region53: #{moments_decoder_forward.1} parent=0
    _
  %s6 = ssub.s32 1, %s4
  %s7 = scalar_select 0, %s6, %s4
  $region1: #{moments_decoder_forward.1} parent=0
    #allocation2 [shape = 'u8[32768]{0}', space=vmem, size = 0x8000, scoped, tag = 'input window, operand 1, single buffered']
    #allocation3 [shape = 's32[2]{0}', space=sflag, size = 0x8, scoped, tag = 'scoped memory for moments_decoder_forward.1']
    #allocation4 [shape = 'u8[32768]{0}', space=vmem, size = 0x8000, scoped, tag = 'input window, operand 2, single buffered']
    #allocation5 [shape = 's32[1]{0}', space=sflag, size = 0x4, scoped, tag = 'scoped memory for moments_decoder_forward.1']
    %8 = vsyncpa [#allocation3], 0
    %9 = vsyncpa [#allocation5], 0
    loop: start=0, step=1, limit=4
    $region2: #{moments_decoder_forward.1} parent=1 // loop_pre_header
      _
    $region3: #{moments_decoder_forward.1} parent=1 // loop_header
      %s11 = sphi 0, %s15
      %p12 = scmp.ge.s32.totalorder %s11, 4
      %s21 = sphi 0, %s23
      %s24 = sphi 0, %s21
      %s25 = sphi 0, %s24
      %s41 = sphi 0, %s25
      %s45 = sphi 0, %s45
      %s47 = sphi 0, %s45
      %s48 = sphi 0, %s47
      %s62 = sphi 0, %s48
      %s66 = sphi 0, %s66
      %s68 = sphi 0, %s66
      %s69 = sphi 0, %s68
      %s83 = sphi 0, %s69
      %s89 = sphi 0, %s91
      %s92 = sphi 0, %s89
      %s93 = sphi 0, %s92
      %s109 = sphi 0, %s93
    $region4: #{moments_decoder_forward.1} parent=1 // loop_header_branch
      %14 = sbr.rel (%p12) target = $region8
    $region5: #{moments_decoder_forward.1} parent=1 // loop_body
      %s16 = ssub.s32 %s11, 1
      %s17 = ssub.s32 %s11, 2
      %s18 = sadd.s32 %s11, 1
      %s19 = ssub.s32 %s11, %s18
      %p20 = scmp.eq.s32.totalorder %s19, 0
      %s22 = sadd.s32 %s21, 1
      %s23 = scalar_select %p20, %s21, %s22
      %p26 = pneg %p20
      %p27 = scmp.eq.s32.totalorder %s11, 1
      %p28 = por %p26, %p27
      %p29 = scmp.ne.s32.totalorder %s21, %s24
      %p30 = scmp.eq.s32.totalorder %s11, 0
      %p31 = por %p29, %p30
      %p32 = scmp.ne.s32.totalorder %s21, %s24
      %p33 = scmp.eq.s32.totalorder %s16, 1
      %p34 = por %p32, %p33
      %p35 = scmp.ne.s32.totalorder %s24, %s25
      %p36 = scmp.eq.s32.totalorder %s16, 0
      %p37 = por %p35, %p36
      %p38 = scmp.ne.s32.totalorder %s24, %s25
      %p39 = scmp.eq.s32.totalorder %s17, 1
      %p40 = por %p38, %p39
      %p42 = scmp.ne.s32.totalorder %s25, %s41
      %p43 = scmp.eq.s32.totalorder %s17, 0
      %p44 = por %p42, %p43
      %s46 = sadd.s32 %s45, 1
      %p49 = scmp.eq.s32.totalorder %s11, 1
      %p50 = scmp.ne.s32.totalorder %s45, %s47
      %p51 = scmp.eq.s32.totalorder %s11, 0
      %p52 = por %p50, %p51
      %p53 = scmp.ne.s32.totalorder %s45, %s47
      %p54 = scmp.eq.s32.totalorder %s16, 1
      %p55 = por %p53, %p54
      %p56 = scmp.ne.s32.totalorder %s47, %s48
      %p57 = scmp.eq.s32.totalorder %s16, 0
      %p58 = por %p56, %p57
      %p59 = scmp.ne.s32.totalorder %s47, %s48
      %p60 = scmp.eq.s32.totalorder %s17, 1
      %p61 = por %p59, %p60
      %p63 = scmp.ne.s32.totalorder %s48, %s62
      %p64 = scmp.eq.s32.totalorder %s17, 0
      %p65 = por %p63, %p64
      %s67 = sadd.s32 %s66, 1
      %p70 = scmp.eq.s32.totalorder %s11, 1
      %p71 = scmp.ne.s32.totalorder %s66, %s68
      %p72 = scmp.eq.s32.totalorder %s11, 0
      %p73 = por %p71, %p72
      %p74 = scmp.ne.s32.totalorder %s66, %s68
      %p75 = scmp.eq.s32.totalorder %s16, 1
      %p76 = por %p74, %p75
      %p77 = scmp.ne.s32.totalorder %s68, %s69
      %p78 = scmp.eq.s32.totalorder %s16, 0
      %p79 = por %p77, %p78
      %p80 = scmp.ne.s32.totalorder %s68, %s69
      %p81 = scmp.eq.s32.totalorder %s17, 1
      %p82 = por %p80, %p81
      %p84 = scmp.ne.s32.totalorder %s69, %s83
      %p85 = scmp.eq.s32.totalorder %s17, 0
      %p86 = por %p84, %p85
      %s87 = ssub.s32 %s11, %s18
      %p88 = scmp.eq.s32.totalorder %s87, 0
      %s90 = sadd.s32 %s89, 1
      %s91 = scalar_select %p88, %s89, %s90
      %p94 = pneg %p88
      %p95 = scmp.eq.s32.totalorder %s11, 1
      %p96 = por %p94, %p95
      %p97 = scmp.ne.s32.totalorder %s89, %s92
      %p98 = scmp.eq.s32.totalorder %s11, 0
      %p99 = por %p97, %p98
      %p100 = scmp.ne.s32.totalorder %s89, %s92
      %p101 = scmp.eq.s32.totalorder %s16, 1
      %p102 = por %p100, %p101
      %p103 = scmp.ne.s32.totalorder %s92, %s93
      %p104 = scmp.eq.s32.totalorder %s16, 0
      %p105 = por %p103, %p104
      %p106 = scmp.ne.s32.totalorder %s92, %s93
      %p107 = scmp.eq.s32.totalorder %s17, 1
      %p108 = por %p106, %p107
      %p110 = scmp.ne.s32.totalorder %s93, %s109
      %p111 = scmp.eq.s32.totalorder %s17, 0
      %p112 = por %p110, %p111
      %p113 = scmp.le.s32.totalorder 1, %s11
      %p114 = scmp.lt.s32.totalorder %s11, 3
      %p115 = pnand %p113, %p114
      %p116 = pneg %p115
      // Predicated region
      $region9: #{moments_decoder_forward.1} parent=5 // pred_check
        _
      $region10: #{moments_decoder_forward.1} parent=5 // pred_check_branch
        %118 = sbr.rel (%p115) target = $region12
      $region11: #{moments_decoder_forward.1} parent=5 // pred_region
        %s119 = ssub.s32 %s11, 1
        // Predicated region
        $region13: #{moments_decoder_forward.1} parent=11 // pred_check
          %p120 = pneg %p58
        $region14: #{moments_decoder_forward.1} parent=11 // pred_check_branch
          %122 = sbr.rel (%p120) target = $region16
        $region15: #{moments_decoder_forward.1} parent=11 // pred_region
          %s124 = ssub.s32 1024, 1024
          %125 = vsyncadd [#allocation3], %s124
          %s126 = sshll.u32 [#allocation2], 4
          %s127 = int_to_ptr.vmem [resolvable:$true] %s126
          %132 = dma.hbm_to_vmem [thread:$0]  %s1, 1024, %s127, [#allocation3], 128, 128, 8
        $region16: #{moments_decoder_forward.1} parent=11 // pred_fallthru
          _
        // Predicated region
        $region17: #{moments_decoder_forward.1} parent=11 // pred_check
          %p133 = pneg %p79
        $region18: #{moments_decoder_forward.1} parent=11 // pred_check_branch
          %135 = sbr.rel (%p133) target = $region20
        $region19: #{moments_decoder_forward.1} parent=11 // pred_region
          %s137 = ssub.s32 1024, 1024
          %138 = vsyncadd [#allocation5], %s137
          %s139 = sshll.u32 [#allocation4], 4
          %s140 = int_to_ptr.vmem [resolvable:$true] %s139
          %145 = dma.hbm_to_vmem [thread:$0]  %s2, 1024, %s140, [#allocation5], 128, 128, 8
        $region20: #{moments_decoder_forward.1} parent=11 // pred_fallthru
          _
      $region12: #{moments_decoder_forward.1} parent=5 // pred_fallthru
        _
      %p146 = scmp.lt.s32.totalorder %s11, 2
      // Predicated region
      $region21: #{moments_decoder_forward.1} parent=5 // pred_check
        %p147 = pneg %p146
      $region22: #{moments_decoder_forward.1} parent=5 // pred_check_branch
        %149 = sbr.rel (%p147) target = $region24
      $region23: #{moments_decoder_forward.1} parent=5 // pred_region
        // Predicated region
        $region25: #{moments_decoder_forward.1} parent=23 // pred_check
          %p150 = pneg %p31
        $region26: #{moments_decoder_forward.1} parent=23 // pred_check_branch
          %152 = sbr.rel (%p150) target = $region28
        $region27: #{moments_decoder_forward.1} parent=23 // pred_region
          %p153 = scmp.lt.s32.totalorder %s11, 1
          %s154 = scalar_select %p153, %s11, 1
          %s155 = smul.addr %s154, 8
          %s156 = scalar_lea.vmem %s0, %s155
        $region28: #{moments_decoder_forward.1} parent=23 // pred_fallthru
          _
      $region24: #{moments_decoder_forward.1} parent=5 // pred_fallthru
        _
      %p157 = scmp.le.s32.totalorder 1, %s11
      %p158 = scmp.lt.s32.totalorder %s11, 3
      %p159 = pnand %p157, %p158
      %p160 = pneg %p159
      // Predicated region
      $region29: #{moments_decoder_forward.1} parent=5 // pred_check
        _
      $region30: #{moments_decoder_forward.1} parent=5 // pred_check_branch
        %162 = sbr.rel (%p159) target = $region32
      $region31: #{moments_decoder_forward.1} parent=5 // pred_region
        %s163 = ssub.s32 %s11, 1
        // Predicated region
        $region33: #{moments_decoder_forward.1} parent=31 // pred_check
          %p164 = pneg %p58
        $region34: #{moments_decoder_forward.1} parent=31 // pred_check_branch
          %166 = sbr.rel (%p164) target = $region36
        $region35: #{moments_decoder_forward.1} parent=31 // pred_region
          %167 = dma.done [#allocation3], 1024
        $region36: #{moments_decoder_forward.1} parent=31 // pred_fallthru
          _
        // Predicated region
        $region37: #{moments_decoder_forward.1} parent=31 // pred_check
          %p168 = pneg %p79
        $region38: #{moments_decoder_forward.1} parent=31 // pred_check_branch
          %170 = sbr.rel (%p168) target = $region40
        $region39: #{moments_decoder_forward.1} parent=31 // pred_region
          %171 = dma.done [#allocation5], 1024
        $region40: #{moments_decoder_forward.1} parent=31 // pred_fallthru
          _
        %p172 = scmp.lt.s32.totalorder %s16, 1
        %s173 = scalar_select %p172, %s16, 1
        %s174 = smul.addr %s173, 8
        %s175 = scalar_lea.vmem %s0, %s174
        %p176 = pneg %p37
        %p177 = pneg %p34
        %p178 = pneg %p58
        %p179 = pneg %p55
        %p180 = pneg %p79
        %p181 = pneg %p76
        %p182 = pneg %p105
        %p183 = pneg %p102
        %p184 = scmp.lt.s32.totalorder %s16, 1
        %s185 = scalar_select %p184, %s16, 1
        %s186 = smul.addr %s185, 8
        %s187 = scalar_lea.vmem %s3, %s186
        %p188 = scmp.lt.s32.totalorder %s16, 1
        %s189 = scalar_select %p188, %s16, 1
        %s190 = smul.addr %s189, 8
        %s191 = scalar_lea.vmem %s0, %s190
        %p192 = scmp.lt.s32.totalorder %s16, 1
        %s193 = scalar_select %p192, %s16, 1
        %s194 = smul.addr %s193, 8
        %s195 = scalar_lea.vmem %s3, %s194
        %v196 = vld [vmem:[%s191] sm:$0x3f]
        %v197 = vld [vmem:[#allocation2] sm:$0xff]
        %v198 = vld [vmem:[#allocation2 + $0x8] sm:$0xff]
        %v199 = vld [vmem:[#allocation2 + $0x10] sm:$0xff]
        %v200 = vld [vmem:[#allocation2 + $0x18] sm:$0xff]
        %v201 = vld [vmem:[#allocation2 + $0x20] sm:$0xff]
        %v202 = vld [vmem:[#allocation2 + $0x28] sm:$0xff]
        %v203 = vld [vmem:[#allocation2 + $0x30] sm:$0xff]
        %v204 = vld [vmem:[#allocation4] sm:$0xff]
        %v205 = vld [vmem:[#allocation4 + $0x8] sm:$0xff]
        %v206 = vld [vmem:[#allocation4 + $0x10] sm:$0xff]
        %v207 = vld [vmem:[#allocation4 + $0x18] sm:$0xff]
        %v208 = vld [vmem:[#allocation4 + $0x20] sm:$0xff]
        %v209 = vld [vmem:[#allocation4 + $0x28] sm:$0xff]
        %v210 = vld [vmem:[#allocation4 + $0x30] sm:$0xff]
        %212 = vset.pattern.permute.xlu0 0
        %213 = vperm.xlu0 %212, %v204
        %v214 = vpop.permute.xlu0 %213
        %217 = vset.pattern.permute.xlu0 0
        %218 = vperm.xlu0 %217, %v205
        %v219 = vpop.permute.xlu0 %218
        %vm221 = vcmask 48128
        %v223 = vsel %vm221, %v197, 0
        %v226 = vsel %vm221, %v198, 0
        %vm228 = vcmask 1045504
        %v230 = vsel %vm228, %v196, 0
        %232 = vmatprep.subr.mxu0 0.0
        %233 = vmatpush1.msra.mxu0 %v230
        %234 = vmatprep.subr.mxu0 0.0
        %235 = vmatpush1.msra.mxu0 0.0
        %236 = vmatprep.subr.mxu0 0.0
        %237 = vmatpush1.msra.mxu0 0.0
        %238 = vmatprep.subr.mxu0 0.0
        %239 = vmatpush1.msra.mxu0 0.0
        %240 = vmatprep.subr.mxu0 0.0
        %241 = vmatpush1.msra.mxu0 0.0
        %242 = vmatprep.subr.mxu0 0.0
        %243 = vmatpush1.msra.mxu0 0.0
        %244 = vmatprep.subr.mxu0 0.0
        %245 = vmatpush1.msra.mxu0 0.0
        %246 = vmatprep.subr.mxu0 0.0
        %247 = vmatpush1.msra.mxu0 0.0
        %248 = vmatprep.subr.mxu0 0.0
        %249 = vmatpush1.msra.mxu0 0.0
        %250 = vmatprep.subr.mxu0 0.0
        %251 = vmatpush1.msra.mxu0 0.0
        %252 = vmatprep.subr.mxu0 0.0
        %253 = vmatpush1.msra.mxu0 0.0
        %254 = vmatprep.subr.mxu0 0.0
        %255 = vmatpush1.msra.mxu0 0.0
        %256 = vmatprep.subr.mxu0 0.0
        %257 = vmatpush1.msra.mxu0 0.0
        %258 = vmatprep.subr.mxu0 0.0
        %259 = vmatpush1.msra.mxu0 0.0
        %260 = vmatprep.subr.mxu0 0.0
        %261 = vmatpush1.msra.mxu0 0.0
        %262 = vmatprep.subr.mxu0 0.0
        %263 = vmatpush1.msra.mxu0 0.0
        %264 = vmatprep.subr.mxu0 0.0
        %265 = vmatpush1.msra.mxu0 0.0
        %266 = vmatprep.subr.mxu0 0.0
        %267 = vmatpush1.msra.mxu0 0.0
        %268 = vmatprep.subr.mxu0 0.0
        %269 = vmatpush1.msra.mxu0 0.0
        %270 = vmatprep.subr.mxu0 0.0
        %271 = vmatpush1.msra.mxu0 0.0
        %272 = vmatprep.subr.mxu0 0.0
        %273 = vmatpush1.msra.mxu0 0.0
        %274 = vmatprep.subr.mxu0 0.0
        %275 = vmatpush1.msra.mxu0 0.0
        %276 = vmatprep.subr.mxu0 0.0
        %277 = vmatpush1.msra.mxu0 0.0
        %278 = vmatprep.subr.mxu0 0.0
        %279 = vmatpush1.msra.mxu0 0.0
        %280 = vmatprep.subr.mxu0 0.0
        %281 = vmatpush1.msra.mxu0 0.0
        %282 = vmatprep.subr.mxu0 0.0
        %283 = vmatpush1.msra.mxu0 0.0
        %284 = vmatprep.subr.mxu0 0.0
        %285 = vmatpush1.msra.mxu0 0.0
        %286 = vmatprep.subr.mxu0 0.0
        %287 = vmatpush1.msra.mxu0 0.0
        %288 = vmatprep.subr.mxu0 0.0
        %289 = vmatpush1.msra.mxu0 0.0
        %290 = vmatprep.subr.mxu0 0.0
        %291 = vmatpush1.msra.mxu0 0.0
        %292 = vmatprep.subr.mxu0 0.0
        %293 = vmatpush1.msra.mxu0 0.0
        %294 = vmatprep.subr.mxu0 0.0
        %295 = vmatpush1.msra.mxu0 0.0
        %296 = vmatprep.mubr.f32.mxu0 0.0
        %297 = vmatmul.mubr.f32.gmra.mrb[0].mxu0 %v223
        %v298 = vpop.f32.mrb[0].mxu0
        %v299 = vadd.f32 %v214, %v298
        %v300 = vpop.f32.mrb[0].mxu0
        %301 = vmatprep.mubr.f32.mxu0 0.0
        %302 = vmatmul.mubr.f32.gmra.mrb[0].mxu0 %v226
        %v303 = vpop.f32.mrb[0].mxu0
        %v304 = vadd.f32 %v219, %v303
        %v305 = vpop.f32.mrb[0].mxu0
        %306 = vdwg.mxu0
        %v307 = vmul.f32 %v299, 0.01
        %v308 = vmul.f32 %v304, 0.01
        %v309 = vmax.f32 %v299, %v307
        %v310 = vmax.f32 %v304, %v308
        %312 = vset.pattern.permute.xlu0 0
        %313 = vperm.xlu0 %312, %v206
        %v314 = vpop.permute.xlu0 %313
        %317 = vset.pattern.permute.xlu0 0
        %318 = vperm.xlu0 %317, %v207
        %v319 = vpop.permute.xlu0 %318
        %vm321 = vcmask 130048
        %v323 = vsel %vm321, %v199, 0
        %v326 = vsel %vm321, %v200, 0
        %328 = vmatprep.subr.mxu0 0.0
        %329 = vmatpush1.msra.mxu0 %v309
        %330 = vmatprep.subr.mxu0 0.0
        %331 = vmatpush1.msra.mxu0 %v310
        %332 = vmatprep.subr.mxu0 0.0
        %333 = vmatpush1.msra.mxu0 0.0
        %334 = vmatprep.subr.mxu0 0.0
        %335 = vmatpush1.msra.mxu0 0.0
        %336 = vmatprep.subr.mxu0 0.0
        %337 = vmatpush1.msra.mxu0 0.0
        %338 = vmatprep.subr.mxu0 0.0
        %339 = vmatpush1.msra.mxu0 0.0
        %340 = vmatprep.subr.mxu0 0.0
        %341 = vmatpush1.msra.mxu0 0.0
        %342 = vmatprep.subr.mxu0 0.0
        %343 = vmatpush1.msra.mxu0 0.0
        %344 = vmatprep.subr.mxu0 0.0
        %345 = vmatpush1.msra.mxu0 0.0
        %346 = vmatprep.subr.mxu0 0.0
        %347 = vmatpush1.msra.mxu0 0.0
        %348 = vmatprep.subr.mxu0 0.0
        %349 = vmatpush1.msra.mxu0 0.0
        %350 = vmatprep.subr.mxu0 0.0
        %351 = vmatpush1.msra.mxu0 0.0
        %352 = vmatprep.subr.mxu0 0.0
        %353 = vmatpush1.msra.mxu0 0.0
        %354 = vmatprep.subr.mxu0 0.0
        %355 = vmatpush1.msra.mxu0 0.0
        %356 = vmatprep.subr.mxu0 0.0
        %357 = vmatpush1.msra.mxu0 0.0
        %358 = vmatprep.subr.mxu0 0.0
        %359 = vmatpush1.msra.mxu0 0.0
        %360 = vmatprep.subr.mxu0 0.0
        %361 = vmatpush1.msra.mxu0 0.0
        %362 = vmatprep.subr.mxu0 0.0
        %363 = vmatpush1.msra.mxu0 0.0
        %364 = vmatprep.subr.mxu0 0.0
        %365 = vmatpush1.msra.mxu0 0.0
        %366 = vmatprep.subr.mxu0 0.0
        %367 = vmatpush1.msra.mxu0 0.0
        %368 = vmatprep.subr.mxu0 0.0
        %369 = vmatpush1.msra.mxu0 0.0
        %370 = vmatprep.subr.mxu0 0.0
        %371 = vmatpush1.msra.mxu0 0.0
        %372 = vmatprep.subr.mxu0 0.0
        %373 = vmatpush1.msra.mxu0 0.0
        %374 = vmatprep.subr.mxu0 0.0
        %375 = vmatpush1.msra.mxu0 0.0
        %376 = vmatprep.subr.mxu0 0.0
        %377 = vmatpush1.msra.mxu0 0.0
        %378 = vmatprep.subr.mxu0 0.0
        %379 = vmatpush1.msra.mxu0 0.0
        %380 = vmatprep.subr.mxu0 0.0
        %381 = vmatpush1.msra.mxu0 0.0
        %382 = vmatprep.subr.mxu0 0.0
        %383 = vmatpush1.msra.mxu0 0.0
        %384 = vmatprep.subr.mxu0 0.0
        %385 = vmatpush1.msra.mxu0 0.0
        %386 = vmatprep.subr.mxu0 0.0
        %387 = vmatpush1.msra.mxu0 0.0
        %388 = vmatprep.subr.mxu0 0.0
        %389 = vmatpush1.msra.mxu0 0.0
        %390 = vmatprep.subr.mxu0 0.0
        %391 = vmatpush1.msra.mxu0 0.0
        %392 = vmatprep.mubr.f32.mxu0 0.0
        %393 = vmatmul.mubr.f32.gmra.mrb[0].mxu0 %v323
        %v394 = vpop.f32.mrb[0].mxu0
        %v395 = vadd.f32 %v314, %v394
        %v396 = vpop.f32.mrb[0].mxu0
        %397 = vmatprep.mubr.f32.mxu0 0.0
        %398 = vmatmul.mubr.f32.gmra.mrb[0].mxu0 %v326
        %v399 = vpop.f32.mrb[0].mxu0
        %v400 = vadd.f32 %v319, %v399
        %v401 = vpop.f32.mrb[0].mxu0
        %402 = vdwg.mxu0
        %v403 = vmul.f32 %v395, 0.01
        %v404 = vmul.f32 %v400, 0.01
        %v405 = vmax.f32 %v395, %v403
        %v406 = vmax.f32 %v400, %v404
        %408 = vset.pattern.permute.xlu0 0
        %409 = vperm.xlu0 %408, %v208
        %v410 = vpop.permute.xlu0 %409
        %413 = vset.pattern.permute.xlu0 0
        %414 = vperm.xlu0 %413, %v209
        %v415 = vpop.permute.xlu0 %414
        %v418 = vsel %vm321, %v201, 0
        %v421 = vsel %vm321, %v202, 0
        %423 = vmatprep.subr.mxu0 0.0
        %424 = vmatpush1.msra.mxu0 %v405
        %425 = vmatprep.subr.mxu0 0.0
        %426 = vmatpush1.msra.mxu0 %v406
        %427 = vmatprep.subr.mxu0 0.0
        %428 = vmatpush1.msra.mxu0 0.0
        %429 = vmatprep.subr.mxu0 0.0
        %430 = vmatpush1.msra.mxu0 0.0
        %431 = vmatprep.subr.mxu0 0.0
        %432 = vmatpush1.msra.mxu0 0.0
        %433 = vmatprep.subr.mxu0 0.0
        %434 = vmatpush1.msra.mxu0 0.0
        %435 = vmatprep.subr.mxu0 0.0
        %436 = vmatpush1.msra.mxu0 0.0
        %437 = vmatprep.subr.mxu0 0.0
        %438 = vmatpush1.msra.mxu0 0.0
        %439 = vmatprep.subr.mxu0 0.0
        %440 = vmatpush1.msra.mxu0 0.0
        %441 = vmatprep.subr.mxu0 0.0
        %442 = vmatpush1.msra.mxu0 0.0
        %443 = vmatprep.subr.mxu0 0.0
        %444 = vmatpush1.msra.mxu0 0.0
        %445 = vmatprep.subr.mxu0 0.0
        %446 = vmatpush1.msra.mxu0 0.0
        %447 = vmatprep.subr.mxu0 0.0
        %448 = vmatpush1.msra.mxu0 0.0
        %449 = vmatprep.subr.mxu0 0.0
        %450 = vmatpush1.msra.mxu0 0.0
        %451 = vmatprep.subr.mxu0 0.0
        %452 = vmatpush1.msra.mxu0 0.0
        %453 = vmatprep.subr.mxu0 0.0
        %454 = vmatpush1.msra.mxu0 0.0
        %455 = vmatprep.subr.mxu0 0.0
        %456 = vmatpush1.msra.mxu0 0.0
        %457 = vmatprep.subr.mxu0 0.0
        %458 = vmatpush1.msra.mxu0 0.0
        %459 = vmatprep.subr.mxu0 0.0
        %460 = vmatpush1.msra.mxu0 0.0
        %461 = vmatprep.subr.mxu0 0.0
        %462 = vmatpush1.msra.mxu0 0.0
        %463 = vmatprep.subr.mxu0 0.0
        %464 = vmatpush1.msra.mxu0 0.0
        %465 = vmatprep.subr.mxu0 0.0
        %466 = vmatpush1.msra.mxu0 0.0
        %467 = vmatprep.subr.mxu0 0.0
        %468 = vmatpush1.msra.mxu0 0.0
        %469 = vmatprep.subr.mxu0 0.0
        %470 = vmatpush1.msra.mxu0 0.0
        %471 = vmatprep.subr.mxu0 0.0
        %472 = vmatpush1.msra.mxu0 0.0
        %473 = vmatprep.subr.mxu0 0.0
        %474 = vmatpush1.msra.mxu0 0.0
        %475 = vmatprep.subr.mxu0 0.0
        %476 = vmatpush1.msra.mxu0 0.0
        %477 = vmatprep.subr.mxu0 0.0
        %478 = vmatpush1.msra.mxu0 0.0
        %479 = vmatprep.subr.mxu0 0.0
        %480 = vmatpush1.msra.mxu0 0.0
        %481 = vmatprep.subr.mxu0 0.0
        %482 = vmatpush1.msra.mxu0 0.0
        %483 = vmatprep.subr.mxu0 0.0
        %484 = vmatpush1.msra.mxu0 0.0
        %485 = vmatprep.subr.mxu0 0.0
        %486 = vmatpush1.msra.mxu0 0.0
        %487 = vmatprep.mubr.f32.mxu0 0.0
        %488 = vmatmul.mubr.f32.gmra.mrb[0].mxu0 %v418
        %v489 = vpop.f32.mrb[0].mxu0
        %v490 = vadd.f32 %v410, %v489
        %v491 = vpop.f32.mrb[0].mxu0
        %492 = vmatprep.mubr.f32.mxu0 0.0
        %493 = vmatmul.mubr.f32.gmra.mrb[0].mxu0 %v421
        %v494 = vpop.f32.mrb[0].mxu0
        %v495 = vadd.f32 %v415, %v494
        %v496 = vpop.f32.mrb[0].mxu0
        %497 = vdwg.mxu0
        %v498 = vmul.f32 %v490, 0.01
        %v499 = vmul.f32 %v495, 0.01
        %v500 = vmax.f32 %v490, %v498
        %v501 = vmax.f32 %v495, %v499
        %503 = vset.pattern.permute.xlu0 0
        %504 = vperm.xlu0 %503, %v210
        %v505 = vpop.permute.xlu0 %504
        %v508 = vsel %vm321, %v203, 0
        %510 = vmatprep.subr.mxu0 0.0
        %511 = vmatpush1.msra.mxu0 %v500
        %512 = vmatprep.subr.mxu0 0.0
        %513 = vmatpush1.msra.mxu0 %v501
        %514 = vmatprep.subr.mxu0 0.0
        %515 = vmatpush1.msra.mxu0 0.0
        %516 = vmatprep.subr.mxu0 0.0
        %517 = vmatpush1.msra.mxu0 0.0
        %518 = vmatprep.subr.mxu0 0.0
        %519 = vmatpush1.msra.mxu0 0.0
        %520 = vmatprep.subr.mxu0 0.0
        %521 = vmatpush1.msra.mxu0 0.0
        %522 = vmatprep.subr.mxu0 0.0
        %523 = vmatpush1.msra.mxu0 0.0
        %524 = vmatprep.subr.mxu0 0.0
        %525 = vmatpush1.msra.mxu0 0.0
        %526 = vmatprep.subr.mxu0 0.0
        %527 = vmatpush1.msra.mxu0 0.0
        %528 = vmatprep.subr.mxu0 0.0
        %529 = vmatpush1.msra.mxu0 0.0
        %530 = vmatprep.subr.mxu0 0.0
        %531 = vmatpush1.msra.mxu0 0.0
        %532 = vmatprep.subr.mxu0 0.0
        %533 = vmatpush1.msra.mxu0 0.0
        %534 = vmatprep.subr.mxu0 0.0
        %535 = vmatpush1.msra.mxu0 0.0
        %536 = vmatprep.subr.mxu0 0.0
        %537 = vmatpush1.msra.mxu0 0.0
        %538 = vmatprep.subr.mxu0 0.0
        %539 = vmatpush1.msra.mxu0 0.0
        %540 = vmatprep.subr.mxu0 0.0
        %541 = vmatpush1.msra.mxu0 0.0
        %542 = vmatprep.subr.mxu0 0.0
        %543 = vmatpush1.msra.mxu0 0.0
        %544 = vmatprep.subr.mxu0 0.0
        %545 = vmatpush1.msra.mxu0 0.0
        %546 = vmatprep.subr.mxu0 0.0
        %547 = vmatpush1.msra.mxu0 0.0
        %548 = vmatprep.subr.mxu0 0.0
        %549 = vmatpush1.msra.mxu0 0.0
        %550 = vmatprep.subr.mxu0 0.0
        %551 = vmatpush1.msra.mxu0 0.0
        %552 = vmatprep.subr.mxu0 0.0
        %553 = vmatpush1.msra.mxu0 0.0
        %554 = vmatprep.subr.mxu0 0.0
        %555 = vmatpush1.msra.mxu0 0.0
        %556 = vmatprep.subr.mxu0 0.0
        %557 = vmatpush1.msra.mxu0 0.0
        %558 = vmatprep.subr.mxu0 0.0
        %559 = vmatpush1.msra.mxu0 0.0
        %560 = vmatprep.subr.mxu0 0.0
        %561 = vmatpush1.msra.mxu0 0.0
        %562 = vmatprep.subr.mxu0 0.0
        %563 = vmatpush1.msra.mxu0 0.0
        %564 = vmatprep.subr.mxu0 0.0
        %565 = vmatpush1.msra.mxu0 0.0
        %566 = vmatprep.subr.mxu0 0.0
        %567 = vmatpush1.msra.mxu0 0.0
        %568 = vmatprep.subr.mxu0 0.0
        %569 = vmatpush1.msra.mxu0 0.0
        %570 = vmatprep.subr.mxu0 0.0
        %571 = vmatpush1.msra.mxu0 0.0
        %572 = vmatprep.subr.mxu0 0.0
        %573 = vmatpush1.msra.mxu0 0.0
        %574 = vmatprep.mubr.f32.mxu0 0.0
        %575 = vmatmul.mubr.f32.gmra.mrb[0].mxu0 %v508
        %v576 = vpop.f32.mrb[0].mxu0
        %v577 = vadd.f32 %v505, %v576
        %v578 = vpop.f32.mrb[0].mxu0
        %579 = vdwg.mxu0
        %580 = vst [vmem:[%s195] sm:$0xff] %v577
        %p581 = scmp.lt.s32.totalorder %s16, 1
        %s582 = scalar_select %p581, %s16, 1
        %s583 = smul.addr %s582, 8
        %s584 = scalar_lea.vmem %s3, %s583
        // Predicated region
        $region41: #{moments_decoder_forward.1} parent=31 // pred_check
          %p585 = pneg %p102
        $region42: #{moments_decoder_forward.1} parent=31 // pred_check_branch
          %587 = sbr.rel (%p585) target = $region44
        $region43: #{moments_decoder_forward.1} parent=31 // pred_region
          _
        $region44: #{moments_decoder_forward.1} parent=31 // pred_fallthru
          _
      $region32: #{moments_decoder_forward.1} parent=5 // pred_fallthru
        _
      %p588 = scmp.le.s32.totalorder 2, %s11
      // Predicated region
      $region45: #{moments_decoder_forward.1} parent=5 // pred_check
        %p589 = pneg %p588
      $region46: #{moments_decoder_forward.1} parent=5 // pred_check_branch
        %591 = sbr.rel (%p589) target = $region48
      $region47: #{moments_decoder_forward.1} parent=5 // pred_region
        %s592 = ssub.s32 %s11, 2
        // Predicated region
        $region49: #{moments_decoder_forward.1} parent=47 // pred_check
          %p593 = pneg %p108
        $region50: #{moments_decoder_forward.1} parent=47 // pred_check_branch
          %595 = sbr.rel (%p593) target = $region52
        $region51: #{moments_decoder_forward.1} parent=47 // pred_region
          %p596 = scmp.lt.s32.totalorder %s17, 1
          %s597 = scalar_select %p596, %s17, 1
          %s598 = smul.addr %s597, 8
          %s599 = scalar_lea.vmem %s3, %s598
        $region52: #{moments_decoder_forward.1} parent=47 // pred_fallthru
          _
      $region48: #{moments_decoder_forward.1} parent=5 // pred_fallthru
        _
    $region6: #{moments_decoder_forward.1} parent=1 // loop_footer
      %s15 = sadd.s32 1, %s11
    $region7: #{moments_decoder_forward.1} parent=1 // loop_footer_branch
      %10 = sbr.rel target = $region3
    $region8: #{moments_decoder_forward.1} parent=1 // loop_exit
      _
    %600 = vsyncpa [#allocation3], 1
    %s601 = scalar_lea.sflag [#allocation3], 1
    %602 = vsyncpa %s601, 1
    %603 = vsyncpa [#allocation5], 1

</llo_original>
